<compile_context>
chip_gen: v5e
topology: v5e:2x2
jax: 0.10.0
libtpu: 0.0.40
codegen_flags: <defaults>
</compile_context>

<pallas_src>
import math

import jax
import jax.numpy as jnp
from jax.experimental import pallas as pl
from jax.experimental.pallas import tpu as pltpu

CHANNELS_NUM = 64          # channels_num
SA_KQ = 50                 # sa_kq
SA_V = 5                   # sa_channel_dense_num = cnn_kernel_num * sa_block_num
SAMPLE_LEN = 128           # sample_len (fixed scaling constant in forward)
F_PAD = 128                # fused projection width: 50 + 50 + 5 = 105 -> 128 lanes
INV_SQRT_LEN = 1.0 / math.sqrt(SAMPLE_LEN)


def temporal_attention_kernel(x_ref, w_ref, b_ref, o_ref):
    """One grid step processes a block of `block_b` batches.

    x_ref : (block_b, T, C)    w_ref : (C, F_PAD)  fused [Wk | Wq | Wv | 0]
    b_ref : (1, F_PAD)         o_ref : (block_b, T, SA_V)
    """
    blk_b, T, C = x_ref.shape
    w = w_ref[...]                                   # (C, F_PAD)
    b = b_ref[...]                                   # (1, F_PAD)

    # Single fused projection matmul over the whole batch block:
    # (block_b*T, 64) @ (64, 128) -> (block_b*T, 128).  The leading-dim merge
    # keeps the minor dim intact, so it is a free relabel in VMEM.
    x2 = x_ref[...].reshape(blk_b * T, C)
    h = jnp.dot(x2, w, preferred_element_type=jnp.float32) + b
    h = h.reshape(blk_b, T, F_PAD)                   # (block_b, T, 128)

    # Slice columns and apply activations; fold 1/sqrt(sample_len) into k
    # (scales a (b,T,50) tile instead of the (b,T,T) score tile).
    k = jnp.maximum(h[..., :SA_KQ], 0.0) * INV_SQRT_LEN            # (b, T, 50)
    q = jnp.maximum(h[..., SA_KQ:2 * SA_KQ], 0.0)                  # (b, T, 50)
    v = jnp.tanh(h[..., 2 * SA_KQ:2 * SA_KQ + SA_V])               # (b, T, 5)

    # scores = k @ q^T without materializing a transpose: batched contraction
    # of the last dims (same pattern as flash attention).
    s = jnp.einsum('btf,bsf->bts', k, q,
                   preferred_element_type=jnp.float32)             # (b, T, T)

    # softmax(axis=-1): reciprocal of the (b,T,1) row sums + a multiply
    # instead of a full (b,T,T) divide.
    s = s - jnp.max(s, axis=-1, keepdims=True)
    e = jnp.exp(s)
    p = e * pl.reciprocal(jnp.sum(e, axis=-1, keepdims=True), approx=False)

    # y = softmax(scores) @ v
    y = jnp.einsum('bts,bsf->btf', p, v,
                   preferred_element_type=jnp.float32)             # (b, T, 5)
    o_ref[...] = y.astype(o_ref.dtype)


def temporal_attention(x, wk, bk, wq, bq, wv, bv):
    B, T, C = x.shape
    assert C == CHANNELS_NUM
    assert T % 8 == 0

    # Fuse + lane-pad the projection weights/biases once in the wrapper.
    pad = F_PAD - (2 * SA_KQ + SA_V)
    w_cat = jnp.concatenate([wk, wq, wv, jnp.zeros((C, pad), wk.dtype)], axis=1)
    b_cat = jnp.concatenate([bk, bq, bv, jnp.zeros((1, pad), bk.dtype)], axis=1)

    # Batch blocking: at most 2 grid steps. Two "parallel" steps feed both
    # TensorCores on v7x; on single-TC v5e/v6e this keeps per-step pipeline
    # overhead to a single extra ~0.35us step regardless of B.
    if B >= 2 and B % 2 == 0:
        block_b = B // 2
    else:
        block_b = B
    grid = (B // block_b,)

    return pl.pallas_call(
        temporal_attention_kernel,
        out_shape=jax.ShapeDtypeStruct((B, T, SA_V), x.dtype),
        grid_spec=pltpu.PrefetchScalarGridSpec(
            num_scalar_prefetch=0,
            grid=grid,
            in_specs=[
                pl.BlockSpec((block_b, T, C), lambda i: (i, 0, 0)),   # x
                pl.BlockSpec((C, F_PAD), lambda i: (0, 0)),           # fused W
                pl.BlockSpec((1, F_PAD), lambda i: (0, 0)),           # fused b
            ],
            out_specs=pl.BlockSpec((block_b, T, SA_V), lambda i: (i, 0, 0)),
        ),
        compiler_params=pltpu.CompilerParams(
            dimension_semantics=("parallel",)),
    )(x, w_cat, b_cat)


def init_linear(key, in_features, out_features):
    """Deterministic init matching PyTorch nn.Linear (uniform +/- 1/sqrt(in))."""
    kw, kb = jax.random.split(key)
    bound = 1.0 / math.sqrt(in_features)
    # Stored transposed relative to torch: (in, out) so kernel does x @ W.
    w = jax.random.uniform(kw, (in_features, out_features), jnp.float32,
                           minval=-bound, maxval=bound)
    b = jax.random.uniform(kb, (1, out_features), jnp.float32,
                           minval=-bound, maxval=bound)
    return w, b


def reference(x, wk, bk, wq, bq, wv, bv):
    k = jax.nn.relu(jnp.einsum("btc,cf->btf", x, wk) + bk)
    q = jax.nn.relu(jnp.einsum("btc,cf->btf", x, wq) + bq)
    v = jnp.tanh(jnp.einsum("btc,cf->btf", x, wv) + bv)
    w = jnp.einsum("btf,bsf->bts", k, q) / math.sqrt(SAMPLE_LEN)
    w = jax.nn.softmax(w, axis=-1)
    return jnp.einsum("bts,bsf->btf", w, v)


if __name__ == "__main__":
    key = jax.random.PRNGKey(0)
    kx, kk, kq, kv = jax.random.split(key, 4)

    B, T = 2, 128
    x = jax.random.normal(kx, (B, T, CHANNELS_NUM), jnp.float32)

    wk, bk = init_linear(kk, CHANNELS_NUM, SA_KQ)
    wq, bq = init_linear(kq, CHANNELS_NUM, SA_KQ)
    wv, bv = init_linear(kv, CHANNELS_NUM, SA_V)

    y = temporal_attention(x, wk, bk, wq, bq, wv, bv)
    y = jax.block_until_ready(y)

    y_ref = reference(x, wk, bk, wq, bq, wv, bv)
    assert y.shape == (B, T, SA_V)
    assert jnp.allclose(y, y_ref, atol=1e-3, rtol=1e-3), "mismatch vs JAX reference"

    print("KERNEL_OK")
</pallas_src>

<mosaic_0001>
module attributes {stable_mosaic.version = 11 : i64} {
  func.func @temporal_attention_kernel(%arg0: i32, %arg1: memref<1x128x64xf32, #tpu.memory_space<vmem>>, %arg2: memref<64x128xf32, #tpu.memory_space<vmem>>, %arg3: memref<1x128xf32, #tpu.memory_space<vmem>>, %arg4: memref<1x128x5xf32, #tpu.memory_space<vmem>>) attributes {dimension_semantics = [#tpu.dimension_semantics<parallel>], iteration_bounds = array<i64: 2>, scalar_prefetch = 0 : i64, scratch_operands = 0 : i64, tpu.core_type = #tpu.core_type<tc>, window_params = [{transform_indices = @transform_0, window_bounds = array<i64: 1, 128, 64>}, {pipeline_mode = #tpu.pipeline_mode<synchronous>, transform_indices = @transform_1, window_bounds = array<i64: 64, 128>}, {pipeline_mode = #tpu.pipeline_mode<synchronous>, transform_indices = @transform_2, window_bounds = array<i64: 1, 128>}, {transform_indices = @transform_3, window_bounds = array<i64: 1, 128, 5>}]} {
    %c0 = arith.constant 0 : index
    %c0_0 = arith.constant 0 : index
    %0 = vector.load %arg2[%c0, %c0_0] : memref<64x128xf32, #tpu.memory_space<vmem>>, vector<64x128xf32>
    %c0_1 = arith.constant 0 : index
    %c0_2 = arith.constant 0 : index
    %1 = vector.load %arg3[%c0_1, %c0_2] : memref<1x128xf32, #tpu.memory_space<vmem>>, vector<1x128xf32>
    %c0_3 = arith.constant 0 : index
    %c0_4 = arith.constant 0 : index
    %c0_5 = arith.constant 0 : index
    %2 = vector.load %arg1[%c0_3, %c0_4, %c0_5] : memref<1x128x64xf32, #tpu.memory_space<vmem>>, vector<1x128x64xf32>
    %3 = vector.shape_cast %2 : vector<1x128x64xf32> to vector<128x64xf32>
    %cst = arith.constant dense<0.000000e+00> : vector<128x128xf32>
    %4 = tpu.matmul %3, %0, %cst {dimension_numbers = #tpu.dot_dimension_numbers<[1], [0], [0], [1], [0, 0, 1, 1], [], []>} : vector<128x64xf32>, vector<64x128xf32>, vector<128x128xf32> -> vector<128x128xf32>
    %5 = vector.broadcast %1 : vector<1x128xf32> to vector<128x128xf32>
    %6 = arith.addf %4, %5 : vector<128x128xf32>
    %7 = vector.shape_cast %6 : vector<128x128xf32> to vector<1x128x128xf32>
    %8 = vector.extract_strided_slice %7 {offsets = [0, 0, 0], sizes = [1, 128, 50], strides = [1, 1, 1]} : vector<1x128x128xf32> to vector<1x128x50xf32>
    %cst_6 = arith.constant 0.000000e+00 : f32
    %9 = vector.broadcast %cst_6 : f32 to vector<1x128x50xf32>
    %10 = arith.maximumf %8, %9 : vector<1x128x50xf32>
    %cst_7 = arith.constant 0.0883883461 : f32
    %11 = vector.broadcast %cst_7 : f32 to vector<1x128x50xf32>
    %12 = arith.mulf %10, %11 : vector<1x128x50xf32>
    %13 = vector.extract_strided_slice %7 {offsets = [0, 0, 50], sizes = [1, 128, 50], strides = [1, 1, 1]} : vector<1x128x128xf32> to vector<1x128x50xf32>
    %cst_8 = arith.constant 0.000000e+00 : f32
    %14 = vector.broadcast %cst_8 : f32 to vector<1x128x50xf32>
    %15 = arith.maximumf %13, %14 : vector<1x128x50xf32>
    %16 = vector.extract_strided_slice %7 {offsets = [0, 0, 100], sizes = [1, 128, 5], strides = [1, 1, 1]} : vector<1x128x128xf32> to vector<1x128x5xf32>
    %17 = math.tanh %16 : vector<1x128x5xf32>
    "tpu.trace_start"() <{level = 10 : i32, message = "btf,bsf->bts"}> : () -> ()
    %cst_9 = arith.constant dense<0.000000e+00> : vector<1x128x128xf32>
    %18 = tpu.matmul %12, %15, %cst_9 {dimension_numbers = #tpu.dot_dimension_numbers<[2], [2], [1], [1], [0, 0, 0, 1, 1, 1], [0], [0]>} : vector<1x128x50xf32>, vector<1x128x50xf32>, vector<1x128x128xf32> -> vector<1x128x128xf32>
    "tpu.trace_stop"() : () -> ()
    %cst_10 = arith.constant dense<0xFF800000> : vector<1x128xf32>
    %19 = vector.multi_reduction <maximumf>, %18, %cst_10 [2] : vector<1x128x128xf32> to vector<1x128xf32>
    %20 = vector.shape_cast %19 : vector<1x128xf32> to vector<1x128x1xf32>
    %21 = vector.broadcast %20 : vector<1x128x1xf32> to vector<1x128x128xf32>
    %22 = arith.subf %18, %21 : vector<1x128x128xf32>
    %23 = math.exp %22 : vector<1x128x128xf32>
    %cst_11 = arith.constant dense<0.000000e+00> : vector<1x128xf32>
    %24 = vector.multi_reduction <add>, %23, %cst_11 [2] : vector<1x128x128xf32> to vector<1x128xf32>
    %25 = vector.shape_cast %24 : vector<1x128xf32> to vector<1x128x1xf32>
    %26 = tpu.reciprocal %25 : vector<1x128x1xf32> -> vector<1x128x1xf32>
    %27 = vector.broadcast %26 : vector<1x128x1xf32> to vector<1x128x128xf32>
    %28 = arith.mulf %23, %27 : vector<1x128x128xf32>
    "tpu.trace_start"() <{level = 10 : i32, message = "bts,bsf->btf"}> : () -> ()
    %cst_12 = arith.constant dense<0.000000e+00> : vector<1x128x5xf32>
    %29 = tpu.matmul %28, %17, %cst_12 {dimension_numbers = #tpu.dot_dimension_numbers<[2], [1], [1], [2], [0, 0, 0, 1, 1, 2], [0], [0]>} : vector<1x128x128xf32>, vector<1x128x5xf32>, vector<1x128x5xf32> -> vector<1x128x5xf32>
    "tpu.trace_stop"() : () -> ()
    %c0_13 = arith.constant 0 : index
    %c0_14 = arith.constant 0 : index
    %c0_15 = arith.constant 0 : index
    %30 = vector.load %arg4[%c0_13, %c0_14, %c0_15] : memref<1x128x5xf32, #tpu.memory_space<vmem>>, vector<1x128x5xf32>
    tpu.vector_store %arg4[%c0_13, %c0_14, %c0_15], %29 {strides = array<i32>} : memref<1x128x5xf32, #tpu.memory_space<vmem>>, vector<1x128x5xf32>,
    return
  }
  func.func @transform_0(%arg0: i32) -> (i32, i32, i32) {
    %c0_i32 = arith.constant 0 : i32
    %c0_i32_0 = arith.constant 0 : i32
    %c0_i32_1 = arith.constant 0 : i32
    return %arg0, %c0_i32, %c0_i32_0 : i32, i32, i32
  }
  func.func @transform_1(%arg0: i32) -> (i32, i32) {
    %c0_i32 = arith.constant 0 : i32
    %c0_i32_0 = arith.constant 0 : i32
    %c0_i32_1 = arith.constant 0 : i32
    return %c0_i32, %c0_i32_0 : i32, i32
  }
  func.func @transform_2(%arg0: i32) -> (i32, i32) {
    %c0_i32 = arith.constant 0 : i32
    %c0_i32_0 = arith.constant 0 : i32
    %c0_i32_1 = arith.constant 0 : i32
    return %c0_i32, %c0_i32_0 : i32, i32
  }
  func.func @transform_3(%arg0: i32) -> (i32, i32, i32) {
    %c0_i32 = arith.constant 0 : i32
    %c0_i32_0 = arith.constant 0 : i32
    %c0_i32_1 = arith.constant 0 : i32
    return %arg0, %c0_i32, %c0_i32_0 : i32, i32, i32
  }
}

</mosaic_0001>

<llo_original>
// kernel: tpu_custom_call.1
$region0: #{tpu_custom_call.1}
  #allocation0 [shape = 'u32[]', space=smem, size = 0x4, offset = 0x4, fixed_abs, tag = 'smem constant byte address 0x4 - core index']
  #allocation1 [shape = 'u32[72,128]{1,0:T(1,128)}', space=vmem, size = 0x9000, scoped, tag = 'internal scratch']
  %s0 = inlined_call_operand.vmem [shape: f32[2,128,64], index: 0, kind: input, shape index: {}]
  %s1 = inlined_call_operand.vmem [shape: f32[64,128], index: 1, kind: input, shape index: {}]
  %s2 = inlined_call_operand.vmem [shape: f32[1,128], index: 2, kind: input, shape index: {}]
  %s3 = inlined_call_operand.vmem [shape: f32[2,128,5], index: 3, kind: output, shape index: {}]
  %s4 = sld [smem:[#allocation0]]
  $region45: #{tpu_custom_call.1} parent=0
    _
  %s6 = ssub.s32 1, %s4
  %s7 = scalar_select 0, %s6, %s4
  loop: start=0, step=1, limit=4
  $region2: #{tpu_custom_call.1} parent=0 // loop_pre_header
    _
  $region3: #{tpu_custom_call.1} parent=0 // loop_header
    %s9 = sphi 0, %s13
    %p10 = scmp.ge.s32.totalorder %s9, 4
    %s19 = sphi 0, %s21
    %s22 = sphi 0, %s19
    %s23 = sphi 0, %s22
    %s39 = sphi 0, %s23
    %s43 = sphi 0, %s43
    %s45 = sphi 0, %s43
    %s46 = sphi 0, %s45
    %s60 = sphi 0, %s46
    %s64 = sphi 0, %s64
    %s66 = sphi 0, %s64
    %s67 = sphi 0, %s66
    %s81 = sphi 0, %s67
    %s87 = sphi 0, %s89
    %s90 = sphi 0, %s87
    %s91 = sphi 0, %s90
    %s107 = sphi 0, %s91
  $region4: #{tpu_custom_call.1} parent=0 // loop_header_branch
    %12 = sbr.rel (%p10) target = $region8
  $region5: #{tpu_custom_call.1} parent=0 // loop_body
    %s14 = ssub.s32 %s9, 1
    %s15 = ssub.s32 %s9, 2
    %s16 = sadd.s32 %s9, 1
    %s17 = ssub.s32 %s9, %s16
    %p18 = scmp.eq.s32.totalorder %s17, 0
    %s20 = sadd.s32 %s19, 1
    %s21 = scalar_select %p18, %s19, %s20
    %p24 = pneg %p18
    %p25 = scmp.eq.s32.totalorder %s9, 1
    %p26 = por %p24, %p25
    %p27 = scmp.ne.s32.totalorder %s19, %s22
    %p28 = scmp.eq.s32.totalorder %s9, 0
    %p29 = por %p27, %p28
    %p30 = scmp.ne.s32.totalorder %s19, %s22
    %p31 = scmp.eq.s32.totalorder %s14, 1
    %p32 = por %p30, %p31
    %p33 = scmp.ne.s32.totalorder %s22, %s23
    %p34 = scmp.eq.s32.totalorder %s14, 0
    %p35 = por %p33, %p34
    %p36 = scmp.ne.s32.totalorder %s22, %s23
    %p37 = scmp.eq.s32.totalorder %s15, 1
    %p38 = por %p36, %p37
    %p40 = scmp.ne.s32.totalorder %s23, %s39
    %p41 = scmp.eq.s32.totalorder %s15, 0
    %p42 = por %p40, %p41
    %s44 = sadd.s32 %s43, 1
    %p47 = scmp.eq.s32.totalorder %s9, 1
    %p48 = scmp.ne.s32.totalorder %s43, %s45
    %p49 = scmp.eq.s32.totalorder %s9, 0
    %p50 = por %p48, %p49
    %p51 = scmp.ne.s32.totalorder %s43, %s45
    %p52 = scmp.eq.s32.totalorder %s14, 1
    %p53 = por %p51, %p52
    %p54 = scmp.ne.s32.totalorder %s45, %s46
    %p55 = scmp.eq.s32.totalorder %s14, 0
    %p56 = por %p54, %p55
    %p57 = scmp.ne.s32.totalorder %s45, %s46
    %p58 = scmp.eq.s32.totalorder %s15, 1
    %p59 = por %p57, %p58
    %p61 = scmp.ne.s32.totalorder %s46, %s60
    %p62 = scmp.eq.s32.totalorder %s15, 0
    %p63 = por %p61, %p62
    %s65 = sadd.s32 %s64, 1
    %p68 = scmp.eq.s32.totalorder %s9, 1
    %p69 = scmp.ne.s32.totalorder %s64, %s66
    %p70 = scmp.eq.s32.totalorder %s9, 0
    %p71 = por %p69, %p70
    %p72 = scmp.ne.s32.totalorder %s64, %s66
    %p73 = scmp.eq.s32.totalorder %s14, 1
    %p74 = por %p72, %p73
    %p75 = scmp.ne.s32.totalorder %s66, %s67
    %p76 = scmp.eq.s32.totalorder %s14, 0
    %p77 = por %p75, %p76
    %p78 = scmp.ne.s32.totalorder %s66, %s67
    %p79 = scmp.eq.s32.totalorder %s15, 1
    %p80 = por %p78, %p79
    %p82 = scmp.ne.s32.totalorder %s67, %s81
    %p83 = scmp.eq.s32.totalorder %s15, 0
    %p84 = por %p82, %p83
    %s85 = ssub.s32 %s9, %s16
    %p86 = scmp.eq.s32.totalorder %s85, 0
    %s88 = sadd.s32 %s87, 1
    %s89 = scalar_select %p86, %s87, %s88
    %p92 = pneg %p86
    %p93 = scmp.eq.s32.totalorder %s9, 1
    %p94 = por %p92, %p93
    %p95 = scmp.ne.s32.totalorder %s87, %s90
    %p96 = scmp.eq.s32.totalorder %s9, 0
    %p97 = por %p95, %p96
    %p98 = scmp.ne.s32.totalorder %s87, %s90
    %p99 = scmp.eq.s32.totalorder %s14, 1
    %p100 = por %p98, %p99
    %p101 = scmp.ne.s32.totalorder %s90, %s91
    %p102 = scmp.eq.s32.totalorder %s14, 0
    %p103 = por %p101, %p102
    %p104 = scmp.ne.s32.totalorder %s90, %s91
    %p105 = scmp.eq.s32.totalorder %s15, 1
    %p106 = por %p104, %p105
    %p108 = scmp.ne.s32.totalorder %s91, %s107
    %p109 = scmp.eq.s32.totalorder %s15, 0
    %p110 = por %p108, %p109
    %p111 = scmp.le.s32.totalorder 1, %s9
    %p112 = scmp.lt.s32.totalorder %s9, 3
    %p113 = pnand %p111, %p112
    %p114 = pneg %p113
    // Predicated region
    $region9: #{tpu_custom_call.1} parent=5 // pred_check
      _
    $region10: #{tpu_custom_call.1} parent=5 // pred_check_branch
      %116 = sbr.rel (%p113) target = $region12
    $region11: #{tpu_custom_call.1} parent=5 // pred_region
      %s117 = ssub.s32 %s9, 1
      // Predicated region
      $region13: #{tpu_custom_call.1} parent=11 // pred_check
        %p118 = pneg %p56
      $region14: #{tpu_custom_call.1} parent=11 // pred_check_branch
        %120 = sbr.rel (%p118) target = $region16
      $region15: #{tpu_custom_call.1} parent=11 // pred_region
        _
      $region16: #{tpu_custom_call.1} parent=11 // pred_fallthru
        _
      // Predicated region
      $region17: #{tpu_custom_call.1} parent=11 // pred_check
        %p121 = pneg %p77
      $region18: #{tpu_custom_call.1} parent=11 // pred_check_branch
        %123 = sbr.rel (%p121) target = $region20
      $region19: #{tpu_custom_call.1} parent=11 // pred_region
        _
      $region20: #{tpu_custom_call.1} parent=11 // pred_fallthru
        _
    $region12: #{tpu_custom_call.1} parent=5 // pred_fallthru
      _
    %p124 = scmp.lt.s32.totalorder %s9, 2
    // Predicated region
    $region21: #{tpu_custom_call.1} parent=5 // pred_check
      %p125 = pneg %p124
    $region22: #{tpu_custom_call.1} parent=5 // pred_check_branch
      %127 = sbr.rel (%p125) target = $region24
    $region23: #{tpu_custom_call.1} parent=5 // pred_region
      // Predicated region
      $region25: #{tpu_custom_call.1} parent=23 // pred_check
        %p128 = pneg %p29
      $region26: #{tpu_custom_call.1} parent=23 // pred_check_branch
        %130 = sbr.rel (%p128) target = $region28
      $region27: #{tpu_custom_call.1} parent=23 // pred_region
        %p131 = scmp.lt.s32.totalorder %s9, 1
        %s132 = scalar_select %p131, %s9, 1
        %s133 = smul.addr %s132, 16
        %s134 = smul.addr %s133, 8
        %s135 = scalar_lea.vmem %s0, %s134
      $region28: #{tpu_custom_call.1} parent=23 // pred_fallthru
        _
    $region24: #{tpu_custom_call.1} parent=5 // pred_fallthru
      _
    %p136 = scmp.le.s32.totalorder 1, %s9
    %p137 = scmp.lt.s32.totalorder %s9, 3
    %p138 = pnand %p136, %p137
    %p139 = pneg %p138
    // Predicated region
    $region29: #{tpu_custom_call.1} parent=5 // pred_check
      _
    $region30: #{tpu_custom_call.1} parent=5 // pred_check_branch
      %141 = sbr.rel (%p138) target = $region32
    $region31: #{tpu_custom_call.1} parent=5 // pred_region
      %s142 = ssub.s32 %s9, 1
      %p143 = scmp.lt.s32.totalorder %s14, 1
      %s144 = scalar_select %p143, %s14, 1
      %s145 = smul.addr %s144, 16
      %s146 = smul.addr %s145, 8
      %s147 = scalar_lea.vmem %s0, %s146
      %p148 = pneg %p35
      %p149 = pneg %p32
      %p150 = pneg %p56
      %p151 = pneg %p53
      %p152 = pneg %p77
      %p153 = pneg %p74
      %p154 = pneg %p103
      %p155 = pneg %p100
      %p156 = scmp.lt.s32.totalorder %s14, 1
      %s157 = scalar_select %p156, %s14, 1
      %s158 = smul.addr %s157, 16
      %s159 = smul.addr %s158, 8
      %s160 = scalar_lea.vmem %s3, %s159
      %p161 = scmp.lt.s32.totalorder %s14, 1
      %s162 = scalar_select %p161, %s14, 1
      %s163 = smul.addr %s162, 16
      %s164 = smul.addr %s163, 8
      %s165 = scalar_lea.vmem %s0, %s164
      %p166 = scmp.lt.s32.totalorder %s14, 1
      %s167 = scalar_select %p166, %s14, 1
      %s168 = smul.addr %s167, 16
      %s169 = smul.addr %s168, 8
      %s170 = scalar_lea.vmem %s3, %s169
      %v171 = vld [vmem:[%s1] sm:$0xff]
      %v172 = vld [vmem:[%s1 + $0x8] sm:$0xff]
      %v173 = vld [vmem:[%s1 + $0x10] sm:$0xff]
      %v174 = vld [vmem:[%s1 + $0x18] sm:$0xff]
      %v175 = vld [vmem:[%s1 + $0x20] sm:$0xff]
      %v176 = vld [vmem:[%s1 + $0x28] sm:$0xff]
      %v177 = vld [vmem:[%s1 + $0x30] sm:$0xff]
      %v178 = vld [vmem:[%s1 + $0x38] sm:$0xff]
      %v179 = vld [vmem:[%s2] sm:$0x1]
      %v180 = vld [vmem:[%s165] sm:$0xff]
      %v181 = vld [vmem:[%s165 + $0x8] sm:$0xff]
      %v182 = vld [vmem:[%s165 + $0x10] sm:$0xff]
      %v183 = vld [vmem:[%s165 + $0x18] sm:$0xff]
      %v184 = vld [vmem:[%s165 + $0x20] sm:$0xff]
      %v185 = vld [vmem:[%s165 + $0x28] sm:$0xff]
      %v186 = vld [vmem:[%s165 + $0x30] sm:$0xff]
      %v187 = vld [vmem:[%s165 + $0x38] sm:$0xff]
      %v188 = vld [vmem:[%s165 + $0x40] sm:$0xff]
      %v189 = vld [vmem:[%s165 + $0x48] sm:$0xff]
      %v190 = vld [vmem:[%s165 + $0x50] sm:$0xff]
      %v191 = vld [vmem:[%s165 + $0x58] sm:$0xff]
      %v192 = vld [vmem:[%s165 + $0x60] sm:$0xff]
      %v193 = vld [vmem:[%s165 + $0x68] sm:$0xff]
      %v194 = vld [vmem:[%s165 + $0x70] sm:$0xff]
      %v195 = vld [vmem:[%s165 + $0x78] sm:$0xff]
      %v197 = vperm.slane %v179, 0
      %vm199 = vcmask 523264
      %v201 = vsel %vm199, %v180, 0
      %v204 = vsel %vm199, %v181, 0
      %v207 = vsel %vm199, %v182, 0
      %v210 = vsel %vm199, %v183, 0
      %v213 = vsel %vm199, %v184, 0
      %v216 = vsel %vm199, %v185, 0
      %v219 = vsel %vm199, %v186, 0
      %v222 = vsel %vm199, %v187, 0
      %v225 = vsel %vm199, %v188, 0
      %v228 = vsel %vm199, %v189, 0
      %v231 = vsel %vm199, %v190, 0
      %v234 = vsel %vm199, %v191, 0
      %v237 = vsel %vm199, %v192, 0
      %v240 = vsel %vm199, %v193, 0
      %v243 = vsel %vm199, %v194, 0
      %v246 = vsel %vm199, %v195, 0
      %248 = vmatpush.msra.mxu0 0.0
      %249 = vmatpush.msra.mxu0 0.0
      %250 = vmatpush.msra.mxu0 0.0
      %251 = vmatpush.msra.mxu0 0.0
      %252 = vmatpush.msra.mxu0 0.0
      %253 = vmatpush.msra.mxu0 0.0
      %254 = vmatpush.msra.mxu0 0.0
      %255 = vmatpush.msra.mxu0 0.0
      %256 = vmatpush.msra.mxu0 %v178
      %257 = vmatpush.msra.mxu0 %v177
      %258 = vmatpush.msra.mxu0 %v176
      %259 = vmatpush.msra.mxu0 %v175
      %260 = vmatpush.msra.mxu0 %v174
      %261 = vmatpush.msra.mxu0 %v173
      %262 = vmatpush.msra.mxu0 %v172
      %263 = vmatpush.msra.mxu0 %v171
      %264 = vmatmul.f32.gmra.mxu0 %v201
      %v265 = vpop.f32.mrf.mxu0
      %v266 = vadd.f32 %v197, %v265
      %267 = vmatmul.f32.gmra.mxu0 %v204
      %v268 = vpop.f32.mrf.mxu0
      %v269 = vadd.f32 %v197, %v268
      %270 = vmatmul.f32.gmra.mxu0 %v207
      %v271 = vpop.f32.mrf.mxu0
      %v272 = vadd.f32 %v197, %v271
      %273 = vmatmul.f32.gmra.mxu0 %v210
      %v274 = vpop.f32.mrf.mxu0
      %v275 = vadd.f32 %v197, %v274
      %276 = vmatmul.f32.gmra.mxu0 %v213
      %v277 = vpop.f32.mrf.mxu0
      %v278 = vadd.f32 %v197, %v277
      %279 = vmatmul.f32.gmra.mxu0 %v216
      %v280 = vpop.f32.mrf.mxu0
      %v281 = vadd.f32 %v197, %v280
      %282 = vmatmul.f32.gmra.mxu0 %v219
      %v283 = vpop.f32.mrf.mxu0
      %v284 = vadd.f32 %v197, %v283
      %285 = vmatmul.f32.gmra.mxu0 %v222
      %v286 = vpop.f32.mrf.mxu0
      %v287 = vadd.f32 %v197, %v286
      %288 = vmatmul.f32.gmra.mxu0 %v225
      %v289 = vpop.f32.mrf.mxu0
      %v290 = vadd.f32 %v197, %v289
      %291 = vmatmul.f32.gmra.mxu0 %v228
      %v292 = vpop.f32.mrf.mxu0
      %v293 = vadd.f32 %v197, %v292
      %294 = vmatmul.f32.gmra.mxu0 %v231
      %v295 = vpop.f32.mrf.mxu0
      %v296 = vadd.f32 %v197, %v295
      %297 = vmatmul.f32.gmra.mxu0 %v234
      %v298 = vpop.f32.mrf.mxu0
      %v299 = vadd.f32 %v197, %v298
      %300 = vmatmul.f32.gmra.mxu0 %v237
      %v301 = vpop.f32.mrf.mxu0
      %v302 = vadd.f32 %v197, %v301
      %303 = vmatmul.f32.gmra.mxu0 %v240
      %v304 = vpop.f32.mrf.mxu0
      %v305 = vadd.f32 %v197, %v304
      %306 = vmatmul.f32.gmra.mxu0 %v243
      %v307 = vpop.f32.mrf.mxu0
      %v308 = vadd.f32 %v197, %v307
      %309 = vmatmul.f32.gmra.mxu0 %v246
      %v310 = vpop.f32.mrf.mxu0
      %v311 = vadd.f32 %v197, %v310
      %312 = vdwg.mxu0
      %v313 = vmax.f32 %v266, 0.0
      %v314 = vmax.f32 %v269, 0.0
      %v315 = vmax.f32 %v272, 0.0
      %v316 = vmax.f32 %v275, 0.0
      %v317 = vmax.f32 %v278, 0.0
      %v318 = vmax.f32 %v281, 0.0
      %v319 = vmax.f32 %v284, 0.0
      %v320 = vmax.f32 %v287, 0.0
      %v321 = vmax.f32 %v290, 0.0
      %v322 = vmax.f32 %v293, 0.0
      %v323 = vmax.f32 %v296, 0.0
      %v324 = vmax.f32 %v299, 0.0
      %v325 = vmax.f32 %v302, 0.0
      %v326 = vmax.f32 %v305, 0.0
      %v327 = vmax.f32 %v308, 0.0
      %v328 = vmax.f32 %v311, 0.0
      %v329 = vmul.f32 %v313, 0.088388346
      %v330 = vmul.f32 %v314, 0.088388346
      %v331 = vmul.f32 %v315, 0.088388346
      %v332 = vmul.f32 %v316, 0.088388346
      %v333 = vmul.f32 %v317, 0.088388346
      %v334 = vmul.f32 %v318, 0.088388346
      %v335 = vmul.f32 %v319, 0.088388346
      %v336 = vmul.f32 %v320, 0.088388346
      %v337 = vmul.f32 %v321, 0.088388346
      %v338 = vmul.f32 %v322, 0.088388346
      %v339 = vmul.f32 %v323, 0.088388346
      %v340 = vmul.f32 %v324, 0.088388346
      %v341 = vmul.f32 %v325, 0.088388346
      %v342 = vmul.f32 %v326, 0.088388346
      %v343 = vmul.f32 %v327, 0.088388346
      %v344 = vmul.f32 %v328, 0.088388346
      %v345 = vtanh.pop %v266
      %v346 = vtanh.pop %v269
      %v347 = vtanh.pop %v272
      %v348 = vtanh.pop %v275
      %v349 = vtanh.pop %v278
      %v350 = vtanh.pop %v281
      %v351 = vtanh.pop %v284
      %v352 = vtanh.pop %v287
      %v353 = vtanh.pop %v290
      %v354 = vtanh.pop %v293
      %v355 = vtanh.pop %v296
      %v356 = vtanh.pop %v299
      %v357 = vtanh.pop %v302
      %v358 = vtanh.pop %v305
      %v359 = vtanh.pop %v308
      %v360 = vtanh.pop %v311
      %377 = vrot.lane.b32.xlu0 %v313, 78
      %v378 = vpop.permute.xlu0 %377
      %379 = vrot.lane.b32.xlu0 %v314, 78
      %v380 = vpop.permute.xlu0 %379
      %381 = vrot.lane.b32.xlu0 %v315, 78
      %v382 = vpop.permute.xlu0 %381
      %383 = vrot.lane.b32.xlu0 %v316, 78
      %v384 = vpop.permute.xlu0 %383
      %385 = vrot.lane.b32.xlu0 %v317, 78
      %v386 = vpop.permute.xlu0 %385
      %387 = vrot.lane.b32.xlu0 %v318, 78
      %v388 = vpop.permute.xlu0 %387
      %389 = vrot.lane.b32.xlu0 %v319, 78
      %v390 = vpop.permute.xlu0 %389
      %391 = vrot.lane.b32.xlu0 %v320, 78
      %v392 = vpop.permute.xlu0 %391
      %393 = vrot.lane.b32.xlu0 %v321, 78
      %v394 = vpop.permute.xlu0 %393
      %395 = vrot.lane.b32.xlu0 %v322, 78
      %v396 = vpop.permute.xlu0 %395
      %397 = vrot.lane.b32.xlu0 %v323, 78
      %v398 = vpop.permute.xlu0 %397
      %399 = vrot.lane.b32.xlu0 %v324, 78
      %v400 = vpop.permute.xlu0 %399
      %401 = vrot.lane.b32.xlu0 %v325, 78
      %v402 = vpop.permute.xlu0 %401
      %403 = vrot.lane.b32.xlu0 %v326, 78
      %v404 = vpop.permute.xlu0 %403
      %405 = vrot.lane.b32.xlu0 %v327, 78
      %v406 = vpop.permute.xlu0 %405
      %407 = vrot.lane.b32.xlu0 %v328, 78
      %v408 = vpop.permute.xlu0 %407
      %vm409 = vcmask 408576
      %v411 = vsel %vm409, %v329, 0
      %v414 = vsel %vm409, %v330, 0
      %v417 = vsel %vm409, %v331, 0
      %v420 = vsel %vm409, %v332, 0
      %v423 = vsel %vm409, %v333, 0
      %v426 = vsel %vm409, %v334, 0
      %v429 = vsel %vm409, %v335, 0
      %v432 = vsel %vm409, %v336, 0
      %v435 = vsel %vm409, %v337, 0
      %v438 = vsel %vm409, %v338, 0
      %v441 = vsel %vm409, %v339, 0
      %v444 = vsel %vm409, %v340, 0
      %v447 = vsel %vm409, %v341, 0
      %v450 = vsel %vm409, %v342, 0
      %v453 = vsel %vm409, %v343, 0
      %v456 = vsel %vm409, %v344, 0
      %v458 = vsel %vm409, %v378, 0
      %v460 = vsel %vm409, %v380, 0
      %v462 = vsel %vm409, %v382, 0
      %v464 = vsel %vm409, %v384, 0
      %v466 = vsel %vm409, %v386, 0
      %v468 = vsel %vm409, %v388, 0
      %v470 = vsel %vm409, %v390, 0
      %v472 = vsel %vm409, %v392, 0
      %v474 = vsel %vm409, %v394, 0
      %v476 = vsel %vm409, %v396, 0
      %v478 = vsel %vm409, %v398, 0
      %v480 = vsel %vm409, %v400, 0
      %v482 = vsel %vm409, %v402, 0
      %v484 = vsel %vm409, %v404, 0
      %v486 = vsel %vm409, %v406, 0
      %v488 = vsel %vm409, %v408, 0
      %490 = vmatpush.xpose.msra.mxu0 %v488
      %491 = vmatpush.xpose.msra.mxu0 %v486
      %492 = vmatpush.xpose.msra.mxu0 %v484
      %493 = vmatpush.xpose.msra.mxu0 %v482
      %494 = vmatpush.xpose.msra.mxu0 %v480
      %495 = vmatpush.xpose.msra.mxu0 %v478
      %496 = vmatpush.xpose.msra.mxu0 %v476
      %497 = vmatpush.xpose.msra.mxu0 %v474
      %498 = vmatpush.xpose.msra.mxu0 %v472
      %499 = vmatpush.xpose.msra.mxu0 %v470
      %500 = vmatpush.xpose.msra.mxu0 %v468
      %501 = vmatpush.xpose.msra.mxu0 %v466
      %502 = vmatpush.xpose.msra.mxu0 %v464
      %503 = vmatpush.xpose.msra.mxu0 %v462
      %504 = vmatpush.xpose.msra.mxu0 %v460
      %505 = vmatpush.xpose.msra.mxu0 %v458
      %506 = vmatmul.f32.gmra.mxu0 %v411
      %v507 = vpop.f32.mrf.mxu0
      %v508 = vadd.f32 0.0, %v507
      %509 = vmatmul.f32.gmra.mxu0 %v414
      %v510 = vpop.f32.mrf.mxu0
      %v511 = vadd.f32 0.0, %v510
      %512 = vmatmul.f32.gmra.mxu0 %v417
      %v513 = vpop.f32.mrf.mxu0
      %v514 = vadd.f32 0.0, %v513
      %515 = vmatmul.f32.gmra.mxu0 %v420
      %v516 = vpop.f32.mrf.mxu0
      %v517 = vadd.f32 0.0, %v516
      %518 = vmatmul.f32.gmra.mxu0 %v423
      %v519 = vpop.f32.mrf.mxu0
      %v520 = vadd.f32 0.0, %v519
      %521 = vmatmul.f32.gmra.mxu0 %v426
      %v522 = vpop.f32.mrf.mxu0
      %v523 = vadd.f32 0.0, %v522
      %524 = vmatmul.f32.gmra.mxu0 %v429
      %v525 = vpop.f32.mrf.mxu0
      %v526 = vadd.f32 0.0, %v525
      %527 = vmatmul.f32.gmra.mxu0 %v432
      %v528 = vpop.f32.mrf.mxu0
      %v529 = vadd.f32 0.0, %v528
      %530 = vmatmul.f32.gmra.mxu0 %v435
      %v531 = vpop.f32.mrf.mxu0
      %v532 = vadd.f32 0.0, %v531
      %533 = vmatmul.f32.gmra.mxu0 %v438
      %v534 = vpop.f32.mrf.mxu0
      %v535 = vadd.f32 0.0, %v534
      %536 = vmatmul.f32.gmra.mxu0 %v441
      %v537 = vpop.f32.mrf.mxu0
      %v538 = vadd.f32 0.0, %v537
      %539 = vmatmul.f32.gmra.mxu0 %v444
      %v540 = vpop.f32.mrf.mxu0
      %v541 = vadd.f32 0.0, %v540
      %542 = vmatmul.f32.gmra.mxu0 %v447
      %v543 = vpop.f32.mrf.mxu0
      %v544 = vadd.f32 0.0, %v543
      %545 = vmatmul.f32.gmra.mxu0 %v450
      %v546 = vpop.f32.mrf.mxu0
      %v547 = vadd.f32 0.0, %v546
      %548 = vmatmul.f32.gmra.mxu0 %v453
      %v549 = vpop.f32.mrf.mxu0
      %v550 = vadd.f32 0.0, %v549
      %551 = vmatmul.f32.gmra.mxu0 %v456
      %v552 = vpop.f32.mrf.mxu0
      %v553 = vadd.f32 0.0, %v552
      %554 = vdwg.mxu0
      %555 = vmax.xlane.f32.xlu0 %v508
      %v556 = vpop.xlane.xlu0 %555
      %557 = vmax.xlane.f32.xlu0 %v511
      %v558 = vpop.xlane.xlu0 %557
      %559 = vmax.xlane.f32.xlu0 %v514
      %v560 = vpop.xlane.xlu0 %559
      %561 = vmax.xlane.f32.xlu0 %v517
      %v562 = vpop.xlane.xlu0 %561
      %563 = vmax.xlane.f32.xlu0 %v520
      %v564 = vpop.xlane.xlu0 %563
      %565 = vmax.xlane.f32.xlu0 %v523
      %v566 = vpop.xlane.xlu0 %565
      %567 = vmax.xlane.f32.xlu0 %v526
      %v568 = vpop.xlane.xlu0 %567
      %569 = vmax.xlane.f32.xlu0 %v529
      %v570 = vpop.xlane.xlu0 %569
      %571 = vmax.xlane.f32.xlu0 %v532
      %v572 = vpop.xlane.xlu0 %571
      %573 = vmax.xlane.f32.xlu0 %v535
      %v574 = vpop.xlane.xlu0 %573
      %575 = vmax.xlane.f32.xlu0 %v538
      %v576 = vpop.xlane.xlu0 %575
      %577 = vmax.xlane.f32.xlu0 %v541
      %v578 = vpop.xlane.xlu0 %577
      %579 = vmax.xlane.f32.xlu0 %v544
      %v580 = vpop.xlane.xlu0 %579
      %581 = vmax.xlane.f32.xlu0 %v547
      %v582 = vpop.xlane.xlu0 %581
      %583 = vmax.xlane.f32.xlu0 %v550
      %v584 = vpop.xlane.xlu0 %583
      %585 = vmax.xlane.f32.xlu0 %v553
      %v586 = vpop.xlane.xlu0 %585
      %v587 = vsub.f32 %v508, %v556
      %v588 = vsub.f32 %v511, %v558
      %v589 = vsub.f32 %v514, %v560
      %v590 = vsub.f32 %v517, %v562
      %v591 = vsub.f32 %v520, %v564
      %v592 = vsub.f32 %v523, %v566
      %v593 = vsub.f32 %v526, %v568
      %v594 = vsub.f32 %v529, %v570
      %v595 = vsub.f32 %v532, %v572
      %v596 = vsub.f32 %v535, %v574
      %v597 = vsub.f32 %v538, %v576
      %v598 = vsub.f32 %v541, %v578
      %v599 = vsub.f32 %v544, %v580
      %v600 = vsub.f32 %v547, %v582
      %v601 = vsub.f32 %v550, %v584
      %v602 = vsub.f32 %v553, %v586
      %v603 = vmul.f32 %v587, 1.442695
      %v604 = vpow.pop %v603
      %v605 = vmul.f32 %v588, 1.442695
      %v606 = vpow.pop %v605
      %v607 = vmul.f32 %v589, 1.442695
      %v608 = vpow.pop %v607
      %v609 = vmul.f32 %v590, 1.442695
      %v610 = vpow.pop %v609
      %v611 = vmul.f32 %v591, 1.442695
      %v612 = vpow.pop %v611
      %v613 = vmul.f32 %v592, 1.442695
      %v614 = vpow.pop %v613
      %v615 = vmul.f32 %v593, 1.442695
      %v616 = vpow.pop %v615
      %v617 = vmul.f32 %v594, 1.442695
      %v618 = vpow.pop %v617
      %v619 = vmul.f32 %v595, 1.442695
      %v620 = vpow.pop %v619
      %v621 = vmul.f32 %v596, 1.442695
      %v622 = vpow.pop %v621
      %v623 = vmul.f32 %v597, 1.442695
      %v624 = vpow.pop %v623
      %v625 = vmul.f32 %v598, 1.442695
      %v626 = vpow.pop %v625
      %v627 = vmul.f32 %v599, 1.442695
      %v628 = vpow.pop %v627
      %v629 = vmul.f32 %v600, 1.442695
      %v630 = vpow.pop %v629
      %v631 = vmul.f32 %v601, 1.442695
      %v632 = vpow.pop %v631
      %v633 = vmul.f32 %v602, 1.442695
      %v634 = vpow.pop %v633
      %635 = vadd.xlane.f32.xlu0 %v604
      %v636 = vpop.xlane.xlu0 %635
      %637 = vadd.xlane.f32.xlu0 %v606
      %v638 = vpop.xlane.xlu0 %637
      %639 = vadd.xlane.f32.xlu0 %v608
      %v640 = vpop.xlane.xlu0 %639
      %641 = vadd.xlane.f32.xlu0 %v610
      %v642 = vpop.xlane.xlu0 %641
      %643 = vadd.xlane.f32.xlu0 %v612
      %v644 = vpop.xlane.xlu0 %643
      %645 = vadd.xlane.f32.xlu0 %v614
      %v646 = vpop.xlane.xlu0 %645
      %647 = vadd.xlane.f32.xlu0 %v616
      %v648 = vpop.xlane.xlu0 %647
      %649 = vadd.xlane.f32.xlu0 %v618
      %v650 = vpop.xlane.xlu0 %649
      %651 = vadd.xlane.f32.xlu0 %v620
      %v652 = vpop.xlane.xlu0 %651
      %653 = vadd.xlane.f32.xlu0 %v622
      %v654 = vpop.xlane.xlu0 %653
      %655 = vadd.xlane.f32.xlu0 %v624
      %v656 = vpop.xlane.xlu0 %655
      %657 = vadd.xlane.f32.xlu0 %v626
      %v658 = vpop.xlane.xlu0 %657
      %659 = vadd.xlane.f32.xlu0 %v628
      %v660 = vpop.xlane.xlu0 %659
      %661 = vadd.xlane.f32.xlu0 %v630
      %v662 = vpop.xlane.xlu0 %661
      %663 = vadd.xlane.f32.xlu0 %v632
      %v664 = vpop.xlane.xlu0 %663
      %665 = vadd.xlane.f32.xlu0 %v634
      %v666 = vpop.xlane.xlu0 %665
      %v667 = vrcp.pop %v636
      %v668 = vmul.f32 %v636, %v667
      %v669 = vsub.f32 1.0, %v668
      %v670 = vmul.f32 %v667, %v669
      %v671 = vadd.f32 %v667, %v670
      %vm672 = vweird.f32 %v636
      %vm673 = vweird.f32 %v667
      %vm674 = vmor %vm672, %vm673
      %v675 = vsel %vm674, %v667, %v671
      %v676 = vand.u32 2147483647, %v636
      %vm677 = vcmp.eq.f32.partialorder %v676, 8.507059e+37
      %v678 = vand.u32 %v636, 2147483648
      %v679 = vor.u32 1.1754944e-38, %v678
      %v680 = vsel %vm677, %v679, %v675
      %v681 = vrcp.pop %v638
      %v682 = vmul.f32 %v638, %v681
      %v683 = vsub.f32 1.0, %v682
      %v684 = vmul.f32 %v681, %v683
      %v685 = vadd.f32 %v681, %v684
      %vm686 = vweird.f32 %v638
      %vm687 = vweird.f32 %v681
      %vm688 = vmor %vm686, %vm687
      %v689 = vsel %vm688, %v681, %v685
      %v690 = vand.u32 2147483647, %v638
      %vm691 = vcmp.eq.f32.partialorder %v690, 8.507059e+37
      %v692 = vand.u32 %v638, 2147483648
      %v693 = vor.u32 1.1754944e-38, %v692
      %v694 = vsel %vm691, %v693, %v689
      %v695 = vrcp.pop %v640
      %v696 = vmul.f32 %v640, %v695
      %v697 = vsub.f32 1.0, %v696
      %v698 = vmul.f32 %v695, %v697
      %v699 = vadd.f32 %v695, %v698
      %vm700 = vweird.f32 %v640
      %vm701 = vweird.f32 %v695
      %vm702 = vmor %vm700, %vm701
      %v703 = vsel %vm702, %v695, %v699
      %v704 = vand.u32 2147483647, %v640
      %vm705 = vcmp.eq.f32.partialorder %v704, 8.507059e+37
      %v706 = vand.u32 %v640, 2147483648
      %v707 = vor.u32 1.1754944e-38, %v706
      %v708 = vsel %vm705, %v707, %v703
      %v709 = vrcp.pop %v642
      %v710 = vmul.f32 %v642, %v709
      %v711 = vsub.f32 1.0, %v710
      %v712 = vmul.f32 %v709, %v711
      %v713 = vadd.f32 %v709, %v712
      %vm714 = vweird.f32 %v642
      %vm715 = vweird.f32 %v709
      %vm716 = vmor %vm714, %vm715
      %v717 = vsel %vm716, %v709, %v713
      %v718 = vand.u32 2147483647, %v642
      %vm719 = vcmp.eq.f32.partialorder %v718, 8.507059e+37
      %v720 = vand.u32 %v642, 2147483648
      %v721 = vor.u32 1.1754944e-38, %v720
      %v722 = vsel %vm719, %v721, %v717
      %v723 = vrcp.pop %v644
      %v724 = vmul.f32 %v644, %v723
      %v725 = vsub.f32 1.0, %v724
      %v726 = vmul.f32 %v723, %v725
      %v727 = vadd.f32 %v723, %v726
      %vm728 = vweird.f32 %v644
      %vm729 = vweird.f32 %v723
      %vm730 = vmor %vm728, %vm729
      %v731 = vsel %vm730, %v723, %v727
      %v732 = vand.u32 2147483647, %v644
      %vm733 = vcmp.eq.f32.partialorder %v732, 8.507059e+37
      %v734 = vand.u32 %v644, 2147483648
      %v735 = vor.u32 1.1754944e-38, %v734
      %v736 = vsel %vm733, %v735, %v731
      %v737 = vrcp.pop %v646
      %v738 = vmul.f32 %v646, %v737
      %v739 = vsub.f32 1.0, %v738
      %v740 = vmul.f32 %v737, %v739
      %v741 = vadd.f32 %v737, %v740
      %vm742 = vweird.f32 %v646
      %vm743 = vweird.f32 %v737
      %vm744 = vmor %vm742, %vm743
      %v745 = vsel %vm744, %v737, %v741
      %v746 = vand.u32 2147483647, %v646
      %vm747 = vcmp.eq.f32.partialorder %v746, 8.507059e+37
      %v748 = vand.u32 %v646, 2147483648
      %v749 = vor.u32 1.1754944e-38, %v748
      %v750 = vsel %vm747, %v749, %v745
      %v751 = vrcp.pop %v648
      %v752 = vmul.f32 %v648, %v751
      %v753 = vsub.f32 1.0, %v752
      %v754 = vmul.f32 %v751, %v753
      %v755 = vadd.f32 %v751, %v754
      %vm756 = vweird.f32 %v648
      %vm757 = vweird.f32 %v751
      %vm758 = vmor %vm756, %vm757
      %v759 = vsel %vm758, %v751, %v755
      %v760 = vand.u32 2147483647, %v648
      %vm761 = vcmp.eq.f32.partialorder %v760, 8.507059e+37
      %v762 = vand.u32 %v648, 2147483648
      %v763 = vor.u32 1.1754944e-38, %v762
      %v764 = vsel %vm761, %v763, %v759
      %v765 = vrcp.pop %v650
      %v766 = vmul.f32 %v650, %v765
      %v767 = vsub.f32 1.0, %v766
      %v768 = vmul.f32 %v765, %v767
      %v769 = vadd.f32 %v765, %v768
      %vm770 = vweird.f32 %v650
      %vm771 = vweird.f32 %v765
      %vm772 = vmor %vm770, %vm771
      %v773 = vsel %vm772, %v765, %v769
      %v774 = vand.u32 2147483647, %v650
      %vm775 = vcmp.eq.f32.partialorder %v774, 8.507059e+37
      %v776 = vand.u32 %v650, 2147483648
      %v777 = vor.u32 1.1754944e-38, %v776
      %v778 = vsel %vm775, %v777, %v773
      %v779 = vrcp.pop %v652
      %v780 = vmul.f32 %v652, %v779
      %v781 = vsub.f32 1.0, %v780
      %v782 = vmul.f32 %v779, %v781
      %v783 = vadd.f32 %v779, %v782
      %vm784 = vweird.f32 %v652
      %vm785 = vweird.f32 %v779
      %vm786 = vmor %vm784, %vm785
      %v787 = vsel %vm786, %v779, %v783
      %v788 = vand.u32 2147483647, %v652
      %vm789 = vcmp.eq.f32.partialorder %v788, 8.507059e+37
      %v790 = vand.u32 %v652, 2147483648
      %v791 = vor.u32 1.1754944e-38, %v790
      %v792 = vsel %vm789, %v791, %v787
      %v793 = vrcp.pop %v654
      %v794 = vmul.f32 %v654, %v793
      %v795 = vsub.f32 1.0, %v794
      %v796 = vmul.f32 %v793, %v795
      %v797 = vadd.f32 %v793, %v796
      %vm798 = vweird.f32 %v654
      %vm799 = vweird.f32 %v793
      %vm800 = vmor %vm798, %vm799
      %v801 = vsel %vm800, %v793, %v797
      %v802 = vand.u32 2147483647, %v654
      %vm803 = vcmp.eq.f32.partialorder %v802, 8.507059e+37
      %v804 = vand.u32 %v654, 2147483648
      %v805 = vor.u32 1.1754944e-38, %v804
      %v806 = vsel %vm803, %v805, %v801
      %v807 = vrcp.pop %v656
      %v808 = vmul.f32 %v656, %v807
      %v809 = vsub.f32 1.0, %v808
      %v810 = vmul.f32 %v807, %v809
      %v811 = vadd.f32 %v807, %v810
      %vm812 = vweird.f32 %v656
      %vm813 = vweird.f32 %v807
      %vm814 = vmor %vm812, %vm813
      %v815 = vsel %vm814, %v807, %v811
      %v816 = vand.u32 2147483647, %v656
      %vm817 = vcmp.eq.f32.partialorder %v816, 8.507059e+37
      %v818 = vand.u32 %v656, 2147483648
      %v819 = vor.u32 1.1754944e-38, %v818
      %v820 = vsel %vm817, %v819, %v815
      %v821 = vrcp.pop %v658
      %v822 = vmul.f32 %v658, %v821
      %v823 = vsub.f32 1.0, %v822
      %v824 = vmul.f32 %v821, %v823
      %v825 = vadd.f32 %v821, %v824
      %vm826 = vweird.f32 %v658
      %vm827 = vweird.f32 %v821
      %vm828 = vmor %vm826, %vm827
      %v829 = vsel %vm828, %v821, %v825
      %v830 = vand.u32 2147483647, %v658
      %vm831 = vcmp.eq.f32.partialorder %v830, 8.507059e+37
      %v832 = vand.u32 %v658, 2147483648
      %v833 = vor.u32 1.1754944e-38, %v832
      %v834 = vsel %vm831, %v833, %v829
      %v835 = vrcp.pop %v660
      %v836 = vmul.f32 %v660, %v835
      %v837 = vsub.f32 1.0, %v836
      %v838 = vmul.f32 %v835, %v837
      %v839 = vadd.f32 %v835, %v838
      %vm840 = vweird.f32 %v660
      %vm841 = vweird.f32 %v835
      %vm842 = vmor %vm840, %vm841
      %v843 = vsel %vm842, %v835, %v839
      %v844 = vand.u32 2147483647, %v660
      %vm845 = vcmp.eq.f32.partialorder %v844, 8.507059e+37
      %v846 = vand.u32 %v660, 2147483648
      %v847 = vor.u32 1.1754944e-38, %v846
      %v848 = vsel %vm845, %v847, %v843
      %v849 = vrcp.pop %v662
      %v850 = vmul.f32 %v662, %v849
      %v851 = vsub.f32 1.0, %v850
      %v852 = vmul.f32 %v849, %v851
      %v853 = vadd.f32 %v849, %v852
      %vm854 = vweird.f32 %v662
      %vm855 = vweird.f32 %v849
      %vm856 = vmor %vm854, %vm855
      %v857 = vsel %vm856, %v849, %v853
      %v858 = vand.u32 2147483647, %v662
      %vm859 = vcmp.eq.f32.partialorder %v858, 8.507059e+37
      %v860 = vand.u32 %v662, 2147483648
      %v861 = vor.u32 1.1754944e-38, %v860
      %v862 = vsel %vm859, %v861, %v857
      %v863 = vrcp.pop %v664
      %v864 = vmul.f32 %v664, %v863
      %v865 = vsub.f32 1.0, %v864
      %v866 = vmul.f32 %v863, %v865
      %v867 = vadd.f32 %v863, %v866
      %vm868 = vweird.f32 %v664
      %vm869 = vweird.f32 %v863
      %vm870 = vmor %vm868, %vm869
      %v871 = vsel %vm870, %v863, %v867
      %v872 = vand.u32 2147483647, %v664
      %vm873 = vcmp.eq.f32.partialorder %v872, 8.507059e+37
      %v874 = vand.u32 %v664, 2147483648
      %v875 = vor.u32 1.1754944e-38, %v874
      %v876 = vsel %vm873, %v875, %v871
      %v877 = vrcp.pop %v666
      %v878 = vmul.f32 %v666, %v877
      %v879 = vsub.f32 1.0, %v878
      %v880 = vmul.f32 %v877, %v879
      %v881 = vadd.f32 %v877, %v880
      %vm882 = vweird.f32 %v666
      %vm883 = vweird.f32 %v877
      %vm884 = vmor %vm882, %vm883
      %v885 = vsel %vm884, %v877, %v881
      %v886 = vand.u32 2147483647, %v666
      %vm887 = vcmp.eq.f32.partialorder %v886, 8.507059e+37
      %v888 = vand.u32 %v666, 2147483648
      %v889 = vor.u32 1.1754944e-38, %v888
      %v890 = vsel %vm887, %v889, %v885
      %v891 = vmul.f32 %v604, %v680
      %v892 = vmul.f32 %v606, %v694
      %v893 = vmul.f32 %v608, %v708
      %v894 = vmul.f32 %v610, %v722
      %v895 = vmul.f32 %v612, %v736
      %v896 = vmul.f32 %v614, %v750
      %v897 = vmul.f32 %v616, %v764
      %v898 = vmul.f32 %v618, %v778
      %v899 = vmul.f32 %v620, %v792
      %v900 = vmul.f32 %v622, %v806
      %v901 = vmul.f32 %v624, %v820
      %v902 = vmul.f32 %v626, %v834
      %v903 = vmul.f32 %v628, %v848
      %v904 = vmul.f32 %v630, %v862
      %v905 = vmul.f32 %v632, %v876
      %v906 = vmul.f32 %v634, %v890
      %923 = vrot.lane.b32.xlu0 %v345, 28
      %v924 = vpop.permute.xlu0 %923
      %925 = vrot.lane.b32.xlu0 %v346, 28
      %v926 = vpop.permute.xlu0 %925
      %927 = vrot.lane.b32.xlu0 %v347, 28
      %v928 = vpop.permute.xlu0 %927
      %929 = vrot.lane.b32.xlu0 %v348, 28
      %v930 = vpop.permute.xlu0 %929
      %931 = vrot.lane.b32.xlu0 %v349, 28
      %v932 = vpop.permute.xlu0 %931
      %933 = vrot.lane.b32.xlu0 %v350, 28
      %v934 = vpop.permute.xlu0 %933
      %935 = vrot.lane.b32.xlu0 %v351, 28
      %v936 = vpop.permute.xlu0 %935
      %937 = vrot.lane.b32.xlu0 %v352, 28
      %v938 = vpop.permute.xlu0 %937
      %939 = vrot.lane.b32.xlu0 %v353, 28
      %v940 = vpop.permute.xlu0 %939
      %941 = vrot.lane.b32.xlu0 %v354, 28
      %v942 = vpop.permute.xlu0 %941
      %943 = vrot.lane.b32.xlu0 %v355, 28
      %v944 = vpop.permute.xlu0 %943
      %945 = vrot.lane.b32.xlu0 %v356, 28
      %v946 = vpop.permute.xlu0 %945
      %947 = vrot.lane.b32.xlu0 %v357, 28
      %v948 = vpop.permute.xlu0 %947
      %949 = vrot.lane.b32.xlu0 %v358, 28
      %v950 = vpop.permute.xlu0 %949
      %951 = vrot.lane.b32.xlu0 %v359, 28
      %v952 = vpop.permute.xlu0 %951
      %953 = vrot.lane.b32.xlu0 %v360, 28
      %v954 = vpop.permute.xlu0 %953
      %971 = vmatpush.msra.mxu0 %v954
      %972 = vmatpush.msra.mxu0 %v952
      %973 = vmatpush.msra.mxu0 %v950
      %974 = vmatpush.msra.mxu0 %v948
      %975 = vmatpush.msra.mxu0 %v946
      %976 = vmatpush.msra.mxu0 %v944
      %977 = vmatpush.msra.mxu0 %v942
      %978 = vmatpush.msra.mxu0 %v940
      %979 = vmatpush.msra.mxu0 %v938
      %980 = vmatpush.msra.mxu0 %v936
      %981 = vmatpush.msra.mxu0 %v934
      %982 = vmatpush.msra.mxu0 %v932
      %983 = vmatpush.msra.mxu0 %v930
      %984 = vmatpush.msra.mxu0 %v928
      %985 = vmatpush.msra.mxu0 %v926
      %986 = vmatpush.msra.mxu0 %v924
      %987 = vmatmul.f32.gmra.mxu0 %v891
      %v988 = vpop.f32.mrf.mxu0
      %v989 = vadd.f32 0.0, %v988
      %990 = vmatmul.f32.gmra.mxu0 %v892
      %v991 = vpop.f32.mrf.mxu0
      %v992 = vadd.f32 0.0, %v991
      %993 = vmatmul.f32.gmra.mxu0 %v893
      %v994 = vpop.f32.mrf.mxu0
      %v995 = vadd.f32 0.0, %v994
      %996 = vmatmul.f32.gmra.mxu0 %v894
      %v997 = vpop.f32.mrf.mxu0
      %v998 = vadd.f32 0.0, %v997
      %999 = vmatmul.f32.gmra.mxu0 %v895
      %v1000 = vpop.f32.mrf.mxu0
      %v1001 = vadd.f32 0.0, %v1000
      %1002 = vmatmul.f32.gmra.mxu0 %v896
      %v1003 = vpop.f32.mrf.mxu0
      %v1004 = vadd.f32 0.0, %v1003
      %1005 = vmatmul.f32.gmra.mxu0 %v897
      %v1006 = vpop.f32.mrf.mxu0
      %v1007 = vadd.f32 0.0, %v1006
      %1008 = vmatmul.f32.gmra.mxu0 %v898
      %v1009 = vpop.f32.mrf.mxu0
      %v1010 = vadd.f32 0.0, %v1009
      %1011 = vmatmul.f32.gmra.mxu0 %v899
      %v1012 = vpop.f32.mrf.mxu0
      %v1013 = vadd.f32 0.0, %v1012
      %1014 = vmatmul.f32.gmra.mxu0 %v900
      %v1015 = vpop.f32.mrf.mxu0
      %v1016 = vadd.f32 0.0, %v1015
      %1017 = vmatmul.f32.gmra.mxu0 %v901
      %v1018 = vpop.f32.mrf.mxu0
      %v1019 = vadd.f32 0.0, %v1018
      %1020 = vmatmul.f32.gmra.mxu0 %v902
      %v1021 = vpop.f32.mrf.mxu0
      %v1022 = vadd.f32 0.0, %v1021
      %1023 = vmatmul.f32.gmra.mxu0 %v903
      %v1024 = vpop.f32.mrf.mxu0
      %v1025 = vadd.f32 0.0, %v1024
      %1026 = vmatmul.f32.gmra.mxu0 %v904
      %v1027 = vpop.f32.mrf.mxu0
      %v1028 = vadd.f32 0.0, %v1027
      %1029 = vmatmul.f32.gmra.mxu0 %v905
      %v1030 = vpop.f32.mrf.mxu0
      %v1031 = vadd.f32 0.0, %v1030
      %1032 = vmatmul.f32.gmra.mxu0 %v906
      %v1033 = vpop.f32.mrf.mxu0
      %v1034 = vadd.f32 0.0, %v1033
      %1035 = vdwg.mxu0
      %vm1036 = vcmask 39936
      %1037 = vst.msk [vmem:[%s170] sm:$0xff] %vm1036, %v989
      %1038 = vst.msk [vmem:[%s170 + $0x8] sm:$0xff] %vm1036, %v992
      %1039 = vst.msk [vmem:[%s170 + $0x10] sm:$0xff] %vm1036, %v995
      %1040 = vst.msk [vmem:[%s170 + $0x18] sm:$0xff] %vm1036, %v998
      %1041 = vst.msk [vmem:[%s170 + $0x20] sm:$0xff] %vm1036, %v1001
      %1042 = vst.msk [vmem:[%s170 + $0x28] sm:$0xff] %vm1036, %v1004
      %1043 = vst.msk [vmem:[%s170 + $0x30] sm:$0xff] %vm1036, %v1007
      %1044 = vst.msk [vmem:[%s170 + $0x38] sm:$0xff] %vm1036, %v1010
      %1045 = vst.msk [vmem:[%s170 + $0x40] sm:$0xff] %vm1036, %v1013
      %1046 = vst.msk [vmem:[%s170 + $0x48] sm:$0xff] %vm1036, %v1016
      %1047 = vst.msk [vmem:[%s170 + $0x50] sm:$0xff] %vm1036, %v1019
      %1048 = vst.msk [vmem:[%s170 + $0x58] sm:$0xff] %vm1036, %v1022
      %1049 = vst.msk [vmem:[%s170 + $0x60] sm:$0xff] %vm1036, %v1025
      %1050 = vst.msk [vmem:[%s170 + $0x68] sm:$0xff] %vm1036, %v1028
      %1051 = vst.msk [vmem:[%s170 + $0x70] sm:$0xff] %vm1036, %v1031
      %1052 = vst.msk [vmem:[%s170 + $0x78] sm:$0xff] %vm1036, %v1034
      %p1053 = scmp.lt.s32.totalorder %s14, 1
      %s1054 = scalar_select %p1053, %s14, 1
      %s1055 = smul.addr %s1054, 16
      %s1056 = smul.addr %s1055, 8
      %s1057 = scalar_lea.vmem %s3, %s1056
      // Predicated region
      $region33: #{tpu_custom_call.1} parent=31 // pred_check
        %p1058 = pneg %p100
      $region34: #{tpu_custom_call.1} parent=31 // pred_check_branch
        %1060 = sbr.rel (%p1058) target = $region36
      $region35: #{tpu_custom_call.1} parent=31 // pred_region
        _
      $region36: #{tpu_custom_call.1} parent=31 // pred_fallthru
        _
    $region32: #{tpu_custom_call.1} parent=5 // pred_fallthru
      _
    %p1061 = scmp.le.s32.totalorder 2, %s9
    // Predicated region
    $region37: #{tpu_custom_call.1} parent=5 // pred_check
      %p1062 = pneg %p1061
    $region38: #{tpu_custom_call.1} parent=5 // pred_check_branch
      %1064 = sbr.rel (%p1062) target = $region40
    $region39: #{tpu_custom_call.1} parent=5 // pred_region
      %s1065 = ssub.s32 %s9, 2
      // Predicated region
      $region41: #{tpu_custom_call.1} parent=39 // pred_check
        %p1066 = pneg %p106
      $region42: #{tpu_custom_call.1} parent=39 // pred_check_branch
        %1068 = sbr.rel (%p1066) target = $region44
      $region43: #{tpu_custom_call.1} parent=39 // pred_region
        %p1069 = scmp.lt.s32.totalorder %s15, 1
        %s1070 = scalar_select %p1069, %s15, 1
        %s1071 = smul.addr %s1070, 16
        %s1072 = smul.addr %s1071, 8
        %s1073 = scalar_lea.vmem %s3, %s1072
      $region44: #{tpu_custom_call.1} parent=39 // pred_fallthru
        _
    $region40: #{tpu_custom_call.1} parent=5 // pred_fallthru
      _
  $region6: #{tpu_custom_call.1} parent=0 // loop_footer
    %s13 = sadd.s32 1, %s9
  $region7: #{tpu_custom_call.1} parent=0 // loop_footer_branch
    %8 = sbr.rel target = $region3
  $region8: #{tpu_custom_call.1} parent=0 // loop_exit
    _

</llo_original>
